<compile_context>
chip_gen: v7x
topology: tpu7x:2x2x1
jax: 0.10.0
libtpu: 0.0.40
codegen_flags: <defaults>
</compile_context>

<pallas_src>
import functools
import math

import jax
import jax.numpy as jnp
from jax.experimental import pallas as pl
from jax.experimental.pallas import tpu as pltpu


def _round_up(a: int, b: int) -> int:
    return ((a + b - 1) // b) * b


def _cdiv(a: int, b: int) -> int:
    return (a + b - 1) // b


def _conv_bn_silu_kernel(xb_ref, xh_ref, w_ref, bias_ref, o_ref, xs_ref, *,
                         ww, khs, kws, rb, halo_rows, lane_chunk, fold_taps):
    # xb_ref:   (1, Cin_p, rb*Ww)            body rows of this output-row block
    # xh_ref:   (1, Cin_p, halo_rows*Ww)     next halo_rows rows (aligned halo block)
    # w_ref:    resident folded weights:
    #             fold_taps: (n_cb, cout_blk, KH*KW*Cin_p)
    #             else:      (n_cb, KH*KW, cout_blk, Cin_p)
    # bias_ref: (n_cb, cout_blk, 1)          folded BN + conv bias (f32), resident
    # o_ref:    (1, 1, cout_blk, rb*Ww)      lane-dense output slab (rb*Ww % 128 == 0)
    # xs_ref:   (Cin_p, (rb+halo_rows)*Ww)   VMEM scratch: haloed flat input slab
    cb = pl.program_id(2)
    cout_blk = o_ref.shape[2]
    l_out = o_ref.shape[3]
    body_len = rb * ww
    halo_len = halo_rows * ww

    # Assemble the haloed flat input slab (static, 128-aligned slices).
    xs_ref[:, :body_len] = xb_ref[0]
    xs_ref[:, body_len:body_len + halo_len] = xh_ref[0]

    w_blk = w_ref[cb]                          # dynamic slice of the resident weights
    bias = bias_ref[cb]                        # (cout_blk, 1) f32

    for c in range(l_out // lane_chunk):       # lane-tiled: acc stays <= ~32 vregs
        c0 = c * lane_chunk
        if fold_taps:
            # im2col over the taps: one MXU matmul with K = KH*KW*Cin_p.
            rhs = jnp.concatenate(
                [xs_ref[:, kh * ww + kw + c0:kh * ww + kw + c0 + lane_chunk]
                 for kh in range(khs) for kw in range(kws)], axis=0)
            acc = jnp.dot(w_blk, rhs, preferred_element_type=jnp.float32)
        else:
            acc = jnp.zeros((cout_blk, lane_chunk), jnp.float32)
            for kh in range(khs):
                for kw in range(kws):
                    off = kh * ww + kw + c0
                    acc = acc + jnp.dot(w_blk[kh * kws + kw],
                                        xs_ref[:, off:off + lane_chunk],
                                        preferred_element_type=jnp.float32)
        # Fused epilogue (BN scale already folded into the weights) + SiLU.
        y = acc + bias
        y = y * jax.nn.sigmoid(y)
        o_ref[0, 0, :, c0:c0 + lane_chunk] = y.astype(o_ref.dtype)


def conv_module_forward(x_nchw, conv_w, conv_b, bn_gamma, bn_beta,
                        bn_mean, bn_var, *, stride=1, padding=1, eps=1e-5,
                        compute_dtype=jnp.bfloat16, out_dtype=None, fold_taps=None):
    """Pallas-fused Conv2d + BatchNorm2d(eval) + SiLU.  x_nchw: (N, Cin, H, W)."""
    if stride != 1:
        raise NotImplementedError("this Pallas ConvModule kernel implements stride == 1")

    n, cin, h, w = x_nchw.shape
    cout, cin_w, khs, kws = conv_w.shape
    assert cin_w == cin
    p = padding
    hp, wp = h + 2 * p, w + 2 * p
    ho, wo = hp - khs + 1, wp - kws + 1
    assert ho >= 1 and wo >= 1
    out_dtype = x_nchw.dtype if out_dtype is None else out_dtype
    is_bf16 = jnp.dtype(compute_dtype) == jnp.dtype(jnp.bfloat16)

    # ---------------- tiling ----------------
    cin_sub = 16 if is_bf16 else 8                      # full sublane packing per vreg
    cin_p = _round_up(cin, cin_sub)
    if cout >= 256 and cout % 256 == 0:
        cout_blk = 256                                  # fills the 256-wide v6e/v7x MXU
    elif cout > 128:
        cout_blk = 128
    else:
        cout_blk = _round_up(cout, 8)
    n_cb = _cdiv(cout, cout_blk)
    cout_p = n_cb * cout_blk

    rb = 16 if ho >= 32 else 8                          # output-row block
    assert khs <= rb
    ho_p = _round_up(ho, rb)                            # garbage rows sliced off later
    n_rb = ho_p // rb
    # Smallest divisor of rb that covers the kernel halo -> halo BlockSpec is aligned.
    halo_rows = next(d for d in range(1, rb + 1) if rb % d == 0 and d >= khs)
    lane_q = 128 // math.gcd(halo_rows, 128)
    ww = _round_up(wp, lane_q)                          # halo_rows*Ww % 128 == 0
    l_out = rb * ww                                     # lane-dense output slab width
    l_in = (rb + halo_rows) * ww
    n_rows = ho_p + halo_rows                           # last halo block stays in-bounds

    # Lane chunk: keep the per-chunk f32 accumulator register-resident (<= ~32 vregs).
    units = l_out // 128
    max_units = max(1, min(8, 256 // cout_blk))
    per = max(d for d in range(1, max_units + 1) if units % d == 0)
    lane_chunk = per * 128

    if fold_taps is None:
        fold_taps = cin_p <= 32                         # im2col pays off for shallow Cin

    # ---------------- input: cast, pad (stays NCHW), flatten spatial ----------------
    x = x_nchw.astype(compute_dtype)
    x = jnp.pad(x, ((0, 0), (0, cin_p - cin), (p, n_rows - h - p), (p, ww - w - p)))
    x = x.reshape(n, cin_p, n_rows * ww)

    # ---------------- fold BN (running stats) into weights / bias ----------------
    scale = bn_gamma * jax.lax.rsqrt(bn_var + eps)                    # (Cout,)
    bias = (conv_b - bn_mean) * scale + bn_beta                       # (Cout,)
    wf = conv_w * scale[:, None, None, None]                          # scale into weights
    if fold_taps:
        wk = jnp.transpose(wf, (0, 2, 3, 1))                          # (Cout, KH, KW, Cin)
        wk = jnp.pad(wk, ((0, cout_p - cout), (0, 0), (0, 0), (0, cin_p - cin)))
        wk = wk.reshape(n_cb, cout_blk, khs * kws * cin_p)
    else:
        wk = jnp.transpose(wf, (2, 3, 0, 1)).reshape(khs * kws, cout, cin)
        wk = jnp.pad(wk, ((0, 0), (0, cout_p - cout), (0, cin_p - cin)))
        wk = jnp.transpose(wk.reshape(khs * kws, n_cb, cout_blk, cin_p), (1, 0, 2, 3))
    wk = wk.astype(compute_dtype)
    bias_p = jnp.pad(bias, (0, cout_p - cout)).reshape(n_cb, cout_blk, 1)
    bias_p = bias_p.astype(jnp.float32)

    # ---------------- VMEM budget (double-buffered blocks + resident weights) --------
    csz = jnp.dtype(compute_dtype).itemsize
    osz = jnp.dtype(out_dtype).itemsize
    vmem_need = (2 * cin_p * rb * ww * csz + 2 * cin_p * halo_rows * ww * csz
                 + 2 * wk.size * csz + 2 * bias_p.size * 4
                 + 2 * cout_blk * l_out * osz + cin_p * l_in * csz)
    vmem_limit = 48 * 1024 * 1024                       # v7x-safe (64 MiB physical)
    if vmem_need + (8 << 20) > vmem_limit:
        # TODO(synk): very large layers should shrink cout_blk / rb instead on v7x.
        vmem_limit = min(vmem_need + (16 << 20), 100 * 1024 * 1024)

    kernel = functools.partial(
        _conv_bn_silu_kernel, ww=ww, khs=khs, kws=kws, rb=rb,
        halo_rows=halo_rows, lane_chunk=lane_chunk, fold_taps=fold_taps)

    out_wide = pl.pallas_call(
        kernel,
        out_shape=jax.ShapeDtypeStruct((n, n_cb, cout_blk, ho_p * ww), out_dtype),
        grid_spec=pltpu.PrefetchScalarGridSpec(
            num_scalar_prefetch=0,
            grid=(n, n_rb, n_cb),                       # cout blocks innermost
            in_specs=[
                # Body rows [r*rb, (r+1)*rb): index changes only with (b, r), so the
                # DMA is deduped across the inner cout-block loop.
                pl.BlockSpec((1, cin_p, rb * ww), lambda b, r, cb: (b, 0, r)),
                # Halo rows [(r+1)*rb, (r+1)*rb + halo_rows): aligned since halo_rows|rb.
                pl.BlockSpec((1, cin_p, halo_rows * ww),
                             lambda b, r, cb: (b, 0, (r + 1) * (rb // halo_rows))),
                # Full folded weights / bias resident in VMEM (single DMA).
                pl.BlockSpec(wk.shape, lambda b, r, cb: (0,) * wk.ndim),
                pl.BlockSpec(bias_p.shape, lambda b, r, cb: (0, 0, 0)),
            ],
            out_specs=pl.BlockSpec((1, 1, cout_blk, l_out),
                                   lambda b, r, cb: (b, cb, 0, r)),
            scratch_shapes=[pltpu.VMEM((cin_p, l_in), compute_dtype)],
        ),
        compiler_params=pltpu.CompilerParams(
            dimension_semantics=("parallel", "parallel", "arbitrary"),
            vmem_limit_bytes=int(vmem_limit)),
    )(x, x, wk, bias_p)

    # (N, CB, cout_blk, Ho_p*Ww) -> (N, Cout, Ho, Wo): free reshape + slice of garbage
    # wide columns / padded rows / padded Cout.  Output was produced directly in NCHW.
    out = out_wide.reshape(n, cout_p, ho_p, ww)[:, :cout, :ho, :wo]
    return out


def _reference_forward(x_nchw, conv_w, conv_b, bn_gamma, bn_beta,
                       bn_mean, bn_var, *, stride=1, padding=1, eps=1e-5):
    y = jax.lax.conv_general_dilated(
        x_nchw, conv_w, window_strides=(stride, stride),
        padding=[(padding, padding), (padding, padding)],
        dimension_numbers=("NCHW", "OIHW", "NCHW"),
        precision=jax.lax.Precision.HIGHEST)
    y = y + conv_b[None, :, None, None]
    y = (y - bn_mean[None, :, None, None]) / jnp.sqrt(
        bn_var[None, :, None, None] + eps)
    y = y * bn_gamma[None, :, None, None] + bn_beta[None, :, None, None]
    return y * jax.nn.sigmoid(y)


if __name__ == "__main__":
    key = jax.random.PRNGKey(0)
    kx, kw_, kb, kg, kbt, km, kv = jax.random.split(key, 7)

    N, Cin, H, W = 2, 4, 16, 16
    Cout, KH, KW = 8, 3, 3

    x = jax.random.normal(kx, (N, Cin, H, W), dtype=jnp.float32)
    conv_w = jax.random.normal(kw_, (Cout, Cin, KH, KW), dtype=jnp.float32) * 0.1
    conv_b = jax.random.normal(kb, (Cout,), dtype=jnp.float32) * 0.1
    bn_gamma = 1.0 + 0.1 * jax.random.normal(kg, (Cout,), dtype=jnp.float32)
    bn_beta = 0.1 * jax.random.normal(kbt, (Cout,), dtype=jnp.float32)
    bn_mean = 0.1 * jax.random.normal(km, (Cout,), dtype=jnp.float32)
    bn_var = jnp.abs(jax.random.normal(kv, (Cout,), dtype=jnp.float32)) + 0.5

    ref = _reference_forward(x, conv_w, conv_b, bn_gamma, bn_beta, bn_mean, bn_var,
                             stride=1, padding=1)

    # f32 operands, tap-folded (im2col) path: tight numerical check.
    out = conv_module_forward(x, conv_w, conv_b, bn_gamma, bn_beta, bn_mean, bn_var,
                              stride=1, padding=1, compute_dtype=jnp.float32)
    out = jax.block_until_ready(out)
    assert out.shape == (N, Cout, H, W)
    assert jnp.allclose(out, ref, atol=1e-3, rtol=1e-3), "f32 kernel mismatch vs reference"

    # f32 operands, per-tap matmul path (exercises the large-Cin code path).
    out_tap = conv_module_forward(x, conv_w, conv_b, bn_gamma, bn_beta, bn_mean, bn_var,
                                  stride=1, padding=1, compute_dtype=jnp.float32,
                                  fold_taps=False)
    out_tap = jax.block_until_ready(out_tap)
    assert jnp.allclose(out_tap, ref, atol=1e-3, rtol=1e-3), "tap-path kernel mismatch"

    # bf16 operands (default fast path on v5e/v6e/v7x); f32 accumulation + epilogue.
    out_bf16 = conv_module_forward(x, conv_w, conv_b, bn_gamma, bn_beta, bn_mean, bn_var,
                                   stride=1, padding=1, compute_dtype=jnp.bfloat16)
    out_bf16 = jax.block_until_ready(out_bf16)
    assert out_bf16.shape == (N, Cout, H, W)
    assert jnp.allclose(out_bf16, ref, atol=5e-2, rtol=5e-2), "bf16 kernel mismatch vs reference"

    print("KERNEL_OK")
</pallas_src>

<mosaic_0001>
module attributes {stable_mosaic.version = 11 : i64} {
  func.func @_conv_bn_silu_kernel(%arg0: i32, %arg1: i32, %arg2: i32, %arg3: memref<1x8x256xf32, #tpu.memory_space<vmem>>, %arg4: memref<1x8x128xf32, #tpu.memory_space<vmem>>, %arg5: memref<1x8x72xf32, #tpu.memory_space<vmem>>, %arg6: memref<1x8x1xf32, #tpu.memory_space<vmem>>, %arg7: memref<1x1x8x256xf32, #tpu.memory_space<vmem>>, %arg8: memref<8x384xf32, #tpu.memory_space<vmem>>) attributes {dimension_semantics = [#tpu.dimension_semantics<parallel>, #tpu.dimension_semantics<parallel>, #tpu.dimension_semantics<arbitrary>], iteration_bounds = array<i64: 2, 2, 1>, scalar_prefetch = 0 : i64, scratch_operands = 1 : i64, tpu.core_type = #tpu.core_type<tc>, window_params = [{transform_indices = @transform_0, window_bounds = array<i64: 1, 8, 256>}, {transform_indices = @transform_1, window_bounds = array<i64: 1, 8, 128>}, {pipeline_mode = #tpu.pipeline_mode<synchronous>, transform_indices = @transform_2, window_bounds = array<i64: 1, 8, 72>}, {pipeline_mode = #tpu.pipeline_mode<synchronous>, transform_indices = @transform_3, window_bounds = array<i64: 1, 8, 1>}, {transform_indices = @transform_4, window_bounds = array<i64: 1, 1, 8, 256>}]} {
    %c0 = arith.constant 0 : index
    %c0_0 = arith.constant 0 : index
    %c0_1 = arith.constant 0 : index
    %0 = vector.load %arg3[%c0, %c0_0, %c0_1] : memref<1x8x256xf32, #tpu.memory_space<vmem>>, vector<1x8x256xf32>
    %1 = vector.shape_cast %0 : vector<1x8x256xf32> to vector<8x256xf32>
    %c0_2 = arith.constant 0 : index
    %c0_3 = arith.constant 0 : index
    %2 = vector.load %arg8[%c0_2, %c0_3] : memref<8x384xf32, #tpu.memory_space<vmem>>, vector<8x256xf32>
    tpu.vector_store %arg8[%c0_2, %c0_3], %1 {strides = array<i32>} : memref<8x384xf32, #tpu.memory_space<vmem>>, vector<8x256xf32>,
    %c0_4 = arith.constant 0 : index
    %c0_5 = arith.constant 0 : index
    %c0_6 = arith.constant 0 : index
    %3 = vector.load %arg4[%c0_4, %c0_5, %c0_6] : memref<1x8x128xf32, #tpu.memory_space<vmem>>, vector<1x8x128xf32>
    %4 = vector.shape_cast %3 : vector<1x8x128xf32> to vector<8x128xf32>
    %c0_7 = arith.constant 0 : index
    %c256 = arith.constant 256 : index
    %5 = vector.load %arg8[%c0_7, %c256] : memref<8x384xf32, #tpu.memory_space<vmem>>, vector<8x128xf32>
    tpu.vector_store %arg8[%c0_7, %c256], %4 {strides = array<i32>} : memref<8x384xf32, #tpu.memory_space<vmem>>, vector<8x128xf32>,
    %6 = arith.index_cast %arg2 : i32 to index
    %c0_8 = arith.constant 0 : index
    %c0_9 = arith.constant 0 : index
    %7 = vector.load %arg5[%6, %c0_8, %c0_9] : memref<1x8x72xf32, #tpu.memory_space<vmem>>, vector<1x8x72xf32>
    %8 = vector.shape_cast %7 : vector<1x8x72xf32> to vector<8x72xf32>
    %9 = arith.index_cast %arg2 : i32 to index
    %c0_10 = arith.constant 0 : index
    %c0_11 = arith.constant 0 : index
    %10 = vector.load %arg6[%9, %c0_10, %c0_11] : memref<1x8x1xf32, #tpu.memory_space<vmem>>, vector<1x8x1xf32>
    %11 = vector.shape_cast %10 : vector<1x8x1xf32> to vector<8x1xf32>
    %c0_12 = arith.constant 0 : index
    %c0_13 = arith.constant 0 : index
    %12 = vector.load %arg8[%c0_12, %c0_13] : memref<8x384xf32, #tpu.memory_space<vmem>>, vector<8x256xf32>
    %c0_14 = arith.constant 0 : index
    %c1 = arith.constant 1 : index
    %13 = vector.load %arg8[%c0_14, %c1] : memref<8x384xf32, #tpu.memory_space<vmem>>, vector<8x256xf32>
    %c0_15 = arith.constant 0 : index
    %c2 = arith.constant 2 : index
    %14 = vector.load %arg8[%c0_15, %c2] : memref<8x384xf32, #tpu.memory_space<vmem>>, vector<8x256xf32>
    %c0_16 = arith.constant 0 : index
    %c32 = arith.constant 32 : index
    %15 = vector.load %arg8[%c0_16, %c32] : memref<8x384xf32, #tpu.memory_space<vmem>>, vector<8x256xf32>
    %c0_17 = arith.constant 0 : index
    %c33 = arith.constant 33 : index
    %16 = vector.load %arg8[%c0_17, %c33] : memref<8x384xf32, #tpu.memory_space<vmem>>, vector<8x256xf32>
    %c0_18 = arith.constant 0 : index
    %c34 = arith.constant 34 : index
    %17 = vector.load %arg8[%c0_18, %c34] : memref<8x384xf32, #tpu.memory_space<vmem>>, vector<8x256xf32>
    %c0_19 = arith.constant 0 : index
    %c64 = arith.constant 64 : index
    %18 = vector.load %arg8[%c0_19, %c64] : memref<8x384xf32, #tpu.memory_space<vmem>>, vector<8x256xf32>
    %c0_20 = arith.constant 0 : index
    %c65 = arith.constant 65 : index
    %19 = vector.load %arg8[%c0_20, %c65] : memref<8x384xf32, #tpu.memory_space<vmem>>, vector<8x256xf32>
    %c0_21 = arith.constant 0 : index
    %c66 = arith.constant 66 : index
    %20 = vector.load %arg8[%c0_21, %c66] : memref<8x384xf32, #tpu.memory_space<vmem>>, vector<8x256xf32>
    %21 = tpu.concatenate %12, %13, %14, %15, %16, %17, %18, %19, %20 in 0 : vector<8x256xf32>, vector<8x256xf32>, vector<8x256xf32>, vector<8x256xf32>, vector<8x256xf32>, vector<8x256xf32>, vector<8x256xf32>, vector<8x256xf32>, vector<8x256xf32> -> vector<72x256xf32>
    %cst = arith.constant dense<0.000000e+00> : vector<8x256xf32>
    %22 = tpu.matmul %8, %21, %cst {dimension_numbers = #tpu.dot_dimension_numbers<[1], [0], [0], [1], [0, 0, 1, 1], [], []>} : vector<8x72xf32>, vector<72x256xf32>, vector<8x256xf32> -> vector<8x256xf32>
    %23 = vector.broadcast %11 : vector<8x1xf32> to vector<8x256xf32>
    %24 = arith.addf %22, %23 : vector<8x256xf32>
    %25 = arith.negf %24 : vector<8x256xf32>
    %26 = math.exp %25 : vector<8x256xf32>
    %cst_22 = arith.constant 1.000000e+00 : f32
    %27 = vector.broadcast %cst_22 : f32 to vector<8x256xf32>
    %28 = arith.addf %27, %26 : vector<8x256xf32>
    %29 = arith.divf %27, %28 : vector<8x256xf32>
    %30 = arith.mulf %24, %29 : vector<8x256xf32>
    %c0_23 = arith.constant 0 : index
    %c0_24 = arith.constant 0 : index
    %c0_25 = arith.constant 0 : index
    %c0_26 = arith.constant 0 : index
    %31 = vector.load %arg7[%c0_23, %c0_24, %c0_25, %c0_26] : memref<1x1x8x256xf32, #tpu.memory_space<vmem>>, vector<1x1x8x256xf32>
    %32 = vector.shape_cast %31 : vector<1x1x8x256xf32> to vector<8x256xf32>
    %33 = vector.shape_cast %30 : vector<8x256xf32> to vector<1x1x8x256xf32>
    tpu.vector_store %arg7[%c0_23, %c0_24, %c0_25, %c0_26], %33 {strides = array<i32>} : memref<1x1x8x256xf32, #tpu.memory_space<vmem>>, vector<1x1x8x256xf32>,
    return
  }
  func.func @transform_0(%arg0: i32, %arg1: i32, %arg2: i32) -> (i32, i32, i32) {
    %c0_i32 = arith.constant 0 : i32
    %c0_i32_0 = arith.constant 0 : i32
    return %arg0, %c0_i32, %arg1 : i32, i32, i32
  }
  func.func @transform_1(%arg0: i32, %arg1: i32, %arg2: i32) -> (i32, i32, i32) {
    %c1_i32 = arith.constant 1 : i32
    %0 = arith.addi %arg1, %c1_i32 : i32
    %c2_i32 = arith.constant 2 : i32
    %1 = arith.muli %0, %c2_i32 : i32
    %c0_i32 = arith.constant 0 : i32
    %c0_i32_0 = arith.constant 0 : i32
    return %arg0, %c0_i32, %1 : i32, i32, i32
  }
  func.func @transform_2(%arg0: i32, %arg1: i32, %arg2: i32) -> (i32, i32, i32) {
    %c0_i32 = arith.constant 0 : i32
    %c0_i32_0 = arith.constant 0 : i32
    %c0_i32_1 = arith.constant 0 : i32
    %c0_i32_2 = arith.constant 0 : i32
    return %c0_i32, %c0_i32_0, %c0_i32_1 : i32, i32, i32
  }
  func.func @transform_3(%arg0: i32, %arg1: i32, %arg2: i32) -> (i32, i32, i32) {
    %c0_i32 = arith.constant 0 : i32
    %c0_i32_0 = arith.constant 0 : i32
    %c0_i32_1 = arith.constant 0 : i32
    %c0_i32_2 = arith.constant 0 : i32
    return %c0_i32, %c0_i32_0, %c0_i32_1 : i32, i32, i32
  }
  func.func @transform_4(%arg0: i32, %arg1: i32, %arg2: i32) -> (i32, i32, i32, i32) {
    %c0_i32 = arith.constant 0 : i32
    %c0_i32_0 = arith.constant 0 : i32
    return %arg0, %arg2, %c0_i32, %arg1 : i32, i32, i32, i32
  }
}

</mosaic_0001>

<llo_original>
// kernel: tpu_custom_call.1
$region0: #{tpu_custom_call.1}
  #allocation0 [shape = 'u32[]', space=smem, size = 0x4, offset = 0x4, fixed_abs, tag = 'smem constant byte address 0x4 - core index']
  #allocation1 [shape = 'u32[144,128]{1,0:T(1,128)}', space=vmem, size = 0x12000, scoped, tag = 'internal scratch']
  #allocation2 [shape = 'f32[8,384]{1,0:T(8,128)}', space=vmem, size = 0x3000, scoped, tag = 'scratch operand']
  %s0 = inlined_call_operand.hbm [shape: f32[2,8,640], index: 0, kind: input, shape index: {}]
  %s1 = inlined_call_operand.hbm [shape: f32[2,8,640], index: 1, kind: input, shape index: {}]
  %s2 = inlined_call_operand.vmem [shape: f32[1,8,72], index: 2, kind: input, shape index: {}]
  %s3 = inlined_call_operand.vmem [shape: f32[1,8,1], index: 3, kind: input, shape index: {}]
  %s4 = inlined_call_operand.hbm [shape: f32[2,1,8,512], index: 4, kind: output, shape index: {}]
  %s5 = sld [smem:[#allocation0]]
  $region57: #{tpu_custom_call.1} parent=0
    _
  %s7 = ssub.s32 1, %s5
  %s8 = scalar_select 0, %s7, %s5
  $region1: #{tpu_custom_call.1} parent=0
    #allocation3 [shape = 'u8[16384]{0}', space=vmem, size = 0x4000, scoped, tag = 'input window, operand 0']
    #allocation4 [shape = 's32[2]{0}', space=sflag, size = 0x8, scoped, tag = 'scoped memory for tpu_custom_call.1']
    #allocation5 [shape = 's32[2]{0}', space=sflag, size = 0x8, scoped, tag = 'scoped memory for tpu_custom_call.1']
    #allocation6 [shape = 'u8[8192]{0}', space=vmem, size = 0x2000, scoped, tag = 'input window, operand 1']
    #allocation7 [shape = 's32[2]{0}', space=sflag, size = 0x8, scoped, tag = 'scoped memory for tpu_custom_call.1']
    #allocation8 [shape = 'u8[16384]{0}', space=vmem, size = 0x4000, scoped, tag = 'output window, operand 0']
    %9 = vsyncpa [#allocation4], 0
    %s10 = scalar_lea.sflag [#allocation4], 1
    %11 = vsyncpa %s10, 0
    %12 = vsyncpa [#allocation7], 0
    %s13 = scalar_lea.sflag [#allocation7], 1
    %14 = vsyncpa %s13, 0
    %15 = vsyncpa [#allocation5], 0
    %s16 = scalar_lea.sflag [#allocation5], 1
    %17 = vsyncpa %s16, 0
    loop: start=0, step=1, limit=6
    $region2: #{tpu_custom_call.1} parent=1 // loop_pre_header
      _
    $region3: #{tpu_custom_call.1} parent=1 // loop_header
      %s19 = sphi 0, %s23
      %p20 = scmp.ge.s32.totalorder %s19, 6
      %s26 = sphi 0, %s45
      %s27 = sphi 0, %s41
      %s28 = sphi 0, %s37
      %s29 = sphi 0, %s26
      %s30 = sphi 0, %s27
      %s31 = sphi 0, %s28
      %s32 = sphi 0, %s29
      %s33 = sphi 0, %s30
      %s34 = sphi 0, %s31
      %s50 = sphi 0, %s52
      %s53 = sphi 0, %s50
      %s54 = sphi 0, %s53
      %s70 = sphi 0, %s54
      %s82 = sphi 0, %s84
      %s85 = sphi 0, %s82
      %s86 = sphi 0, %s85
      %s102 = sphi 0, %s86
      %s106 = sphi 0, %s106
      %s108 = sphi 0, %s106
      %s109 = sphi 0, %s108
      %s123 = sphi 0, %s109
      %s127 = sphi 0, %s127
      %s129 = sphi 0, %s127
      %s130 = sphi 0, %s129
      %s144 = sphi 0, %s130
      %s154 = sphi 0, %s156
      %s157 = sphi 0, %s154
      %s158 = sphi 0, %s157
      %s174 = sphi 0, %s158
    $region4: #{tpu_custom_call.1} parent=1 // loop_header_branch
      %22 = sbr.rel (%p20) target = $region8
    $region5: #{tpu_custom_call.1} parent=1 // loop_body
      %s24 = ssub.s32 %s19, 1
      %s25 = ssub.s32 %s19, 2
      %s35 = sadd.s32 1, %s28
      %p36 = scmp.ge.s32.totalorder %s35, 1
      %s37 = scalar_select %p36, 0, %s35
      %s38 = sadd.s32 1, %s27
      %s39 = scalar_select %p36, %s38, %s27
      %p40 = scmp.ge.s32.totalorder %s39, 2
      %s41 = scalar_select %p40, 0, %s39
      %s42 = sadd.s32 1, %s26
      %s43 = scalar_select %p40, %s42, %s26
      %p44 = scmp.ge.s32.totalorder %s43, 2
      %s45 = scalar_select %p44, 0, %s43
      %s46 = ssub.s32 %s26, %s45
      %s47 = ssub.s32 %s27, %s41
      %s48 = sor.u32 %s46, %s47
      %p49 = scmp.eq.s32.totalorder %s48, 0
      %s51 = sadd.s32 %s50, 1
      %s52 = scalar_select %p49, %s50, %s51
      %p55 = pneg %p49
      %p56 = scmp.eq.s32.totalorder %s19, 3
      %p57 = por %p55, %p56
      %p58 = scmp.ne.s32.totalorder %s50, %s53
      %p59 = scmp.eq.s32.totalorder %s19, 0
      %p60 = por %p58, %p59
      %p61 = scmp.ne.s32.totalorder %s50, %s53
      %p62 = scmp.eq.s32.totalorder %s24, 3
      %p63 = por %p61, %p62
      %p64 = scmp.ne.s32.totalorder %s53, %s54
      %p65 = scmp.eq.s32.totalorder %s24, 0
      %p66 = por %p64, %p65
      %p67 = scmp.ne.s32.totalorder %s53, %s54
      %p68 = scmp.eq.s32.totalorder %s25, 3
      %p69 = por %p67, %p68
      %p71 = scmp.ne.s32.totalorder %s54, %s70
      %p72 = scmp.eq.s32.totalorder %s25, 0
      %p73 = por %p71, %p72
      %s74 = sadd.s32 %s27, 1
      %s75 = smul.u32 %s74, 2
      %s76 = sadd.s32 %s41, 1
      %s77 = smul.u32 %s76, 2
      %s78 = ssub.s32 %s26, %s45
      %s79 = ssub.s32 %s75, %s77
      %s80 = sor.u32 %s78, %s79
      %p81 = scmp.eq.s32.totalorder %s80, 0
      %s83 = sadd.s32 %s82, 1
      %s84 = scalar_select %p81, %s82, %s83
      %p87 = pneg %p81
      %p88 = scmp.eq.s32.totalorder %s19, 3
      %p89 = por %p87, %p88
      %p90 = scmp.ne.s32.totalorder %s82, %s85
      %p91 = scmp.eq.s32.totalorder %s19, 0
      %p92 = por %p90, %p91
      %p93 = scmp.ne.s32.totalorder %s82, %s85
      %p94 = scmp.eq.s32.totalorder %s24, 3
      %p95 = por %p93, %p94
      %p96 = scmp.ne.s32.totalorder %s85, %s86
      %p97 = scmp.eq.s32.totalorder %s24, 0
      %p98 = por %p96, %p97
      %p99 = scmp.ne.s32.totalorder %s85, %s86
      %p100 = scmp.eq.s32.totalorder %s25, 3
      %p101 = por %p99, %p100
      %p103 = scmp.ne.s32.totalorder %s86, %s102
      %p104 = scmp.eq.s32.totalorder %s25, 0
      %p105 = por %p103, %p104
      %s107 = sadd.s32 %s106, 1
      %p110 = scmp.eq.s32.totalorder %s19, 3
      %p111 = scmp.ne.s32.totalorder %s106, %s108
      %p112 = scmp.eq.s32.totalorder %s19, 0
      %p113 = por %p111, %p112
      %p114 = scmp.ne.s32.totalorder %s106, %s108
      %p115 = scmp.eq.s32.totalorder %s24, 3
      %p116 = por %p114, %p115
      %p117 = scmp.ne.s32.totalorder %s108, %s109
      %p118 = scmp.eq.s32.totalorder %s24, 0
      %p119 = por %p117, %p118
      %p120 = scmp.ne.s32.totalorder %s108, %s109
      %p121 = scmp.eq.s32.totalorder %s25, 3
      %p122 = por %p120, %p121
      %p124 = scmp.ne.s32.totalorder %s109, %s123
      %p125 = scmp.eq.s32.totalorder %s25, 0
      %p126 = por %p124, %p125
      %s128 = sadd.s32 %s127, 1
      %p131 = scmp.eq.s32.totalorder %s19, 3
      %p132 = scmp.ne.s32.totalorder %s127, %s129
      %p133 = scmp.eq.s32.totalorder %s19, 0
      %p134 = por %p132, %p133
      %p135 = scmp.ne.s32.totalorder %s127, %s129
      %p136 = scmp.eq.s32.totalorder %s24, 3
      %p137 = por %p135, %p136
      %p138 = scmp.ne.s32.totalorder %s129, %s130
      %p139 = scmp.eq.s32.totalorder %s24, 0
      %p140 = por %p138, %p139
      %p141 = scmp.ne.s32.totalorder %s129, %s130
      %p142 = scmp.eq.s32.totalorder %s25, 3
      %p143 = por %p141, %p142
      %p145 = scmp.ne.s32.totalorder %s130, %s144
      %p146 = scmp.eq.s32.totalorder %s25, 0
      %p147 = por %p145, %p146
      %s148 = ssub.s32 %s26, %s45
      %s149 = ssub.s32 %s28, %s37
      %s150 = sor.u32 %s148, %s149
      %s151 = ssub.s32 %s27, %s41
      %s152 = sor.u32 %s150, %s151
      %p153 = scmp.eq.s32.totalorder %s152, 0
      %s155 = sadd.s32 %s154, 1
      %s156 = scalar_select %p153, %s154, %s155
      %p159 = pneg %p153
      %p160 = scmp.eq.s32.totalorder %s19, 3
      %p161 = por %p159, %p160
      %p162 = scmp.ne.s32.totalorder %s154, %s157
      %p163 = scmp.eq.s32.totalorder %s19, 0
      %p164 = por %p162, %p163
      %p165 = scmp.ne.s32.totalorder %s154, %s157
      %p166 = scmp.eq.s32.totalorder %s24, 3
      %p167 = por %p165, %p166
      %p168 = scmp.ne.s32.totalorder %s157, %s158
      %p169 = scmp.eq.s32.totalorder %s24, 0
      %p170 = por %p168, %p169
      %p171 = scmp.ne.s32.totalorder %s157, %s158
      %p172 = scmp.eq.s32.totalorder %s25, 3
      %p173 = por %p171, %p172
      %p175 = scmp.ne.s32.totalorder %s158, %s174
      %p176 = scmp.eq.s32.totalorder %s25, 0
      %p177 = por %p175, %p176
      %p178 = scmp.le.s32.totalorder 1, %s19
      %p179 = scmp.lt.s32.totalorder %s19, 5
      %p180 = pnand %p178, %p179
      %p181 = pneg %p180
      // Predicated region
      $region9: #{tpu_custom_call.1} parent=5 // pred_check
        _
      $region10: #{tpu_custom_call.1} parent=5 // pred_check_branch
        %183 = sbr.rel (%p180) target = $region12
      $region11: #{tpu_custom_call.1} parent=5 // pred_region
        %s184 = ssub.s32 %s19, 1
        // Predicated region
        $region13: #{tpu_custom_call.1} parent=11 // pred_check
          %p185 = pneg %p119
        $region14: #{tpu_custom_call.1} parent=11 // pred_check_branch
          %187 = sbr.rel (%p185) target = $region16
        $region15: #{tpu_custom_call.1} parent=11 // pred_region
          _
        $region16: #{tpu_custom_call.1} parent=11 // pred_fallthru
          _
        // Predicated region
        $region17: #{tpu_custom_call.1} parent=11 // pred_check
          %p188 = pneg %p140
        $region18: #{tpu_custom_call.1} parent=11 // pred_check_branch
          %190 = sbr.rel (%p188) target = $region20
        $region19: #{tpu_custom_call.1} parent=11 // pred_region
          _
        $region20: #{tpu_custom_call.1} parent=11 // pred_fallthru
          _
      $region12: #{tpu_custom_call.1} parent=5 // pred_fallthru
        _
      %p191 = scmp.lt.s32.totalorder %s19, 4
      // Predicated region
      $region21: #{tpu_custom_call.1} parent=5 // pred_check
        %p192 = pneg %p191
      $region22: #{tpu_custom_call.1} parent=5 // pred_check_branch
        %194 = sbr.rel (%p192) target = $region24
      $region23: #{tpu_custom_call.1} parent=5 // pred_region
        // Predicated region
        $region25: #{tpu_custom_call.1} parent=23 // pred_check
          %p195 = pneg %p60
        $region26: #{tpu_custom_call.1} parent=23 // pred_check_branch
          %197 = sbr.rel (%p195) target = $region28
        $region27: #{tpu_custom_call.1} parent=23 // pred_region
          %s198 = sand.u32 %s50, 1
          %s199 = scalar_lea.sflag [#allocation4], %s198
          %s200 = sand.u32 %s50, 1
          %s201 = smul.addr %s200, 16
          %s202 = scalar_lea.vmem [#allocation3], %s201
          %s203 = smul.u32 2, %s27
          %s204 = ssub.s32 5, %s203
          %p205 = scmp.lt.s32.totalorder %s204, 2
          %s206 = scalar_select %p205, %s204, 2
          %s207 = smul.u32 128, %s206
          %s209 = ssub.s32 256, %s207
          %210 = vsyncadd %s199, %s209
          %p211 = scmp.ne.s32.totalorder 0, %s207
          %s212 = smul.addr %s26, 5
          %s213 = sadd.s32 %s203, %s212
          %s214 = smul.addr %s213, 128
          %s215 = scalar_lea.hbm %s0, %s214
          %s216 = smul.u32 %s206, 8
          %s217 = sshll.u32 %s216, 4
          %s218 = sshll.u32 %s202, 4
          %s219 = int_to_ptr.vmem [resolvable:$true] %s218
          %221 = dma.hbm_to_vmem [thread:$0]  (%p211), %s215, %s217, %s219, %s199
        $region28: #{tpu_custom_call.1} parent=23 // pred_fallthru
          _
        // Predicated region
        $region29: #{tpu_custom_call.1} parent=23 // pred_check
          %p222 = pneg %p92
        $region30: #{tpu_custom_call.1} parent=23 // pred_check_branch
          %224 = sbr.rel (%p222) target = $region32
        $region31: #{tpu_custom_call.1} parent=23 // pred_region
          %s225 = sand.u32 %s82, 1
          %s226 = scalar_lea.sflag [#allocation7], %s225
          %s227 = sand.u32 %s82, 1
          %s228 = smul.addr %s227, 8
          %s229 = scalar_lea.vmem [#allocation6], %s228
          %s230 = sadd.s32 %s27, 1
          %s231 = smul.u32 %s230, 2
          %s233 = ssub.s32 128, 128
          %234 = vsyncadd %s226, %s233
          %s235 = smul.addr %s26, 5
          %s236 = sadd.s32 %s231, %s235
          %s237 = smul.addr %s236, 128
          %s238 = scalar_lea.hbm %s1, %s237
          %s240 = sshll.u32 %s229, 4
          %s241 = int_to_ptr.vmem [resolvable:$true] %s240
          %243 = dma.hbm_to_vmem [thread:$0]  %s238, 128, %s241, %s226
        $region32: #{tpu_custom_call.1} parent=23 // pred_fallthru
          _
      $region24: #{tpu_custom_call.1} parent=5 // pred_fallthru
        _
      %p244 = scmp.le.s32.totalorder 1, %s19
      %p245 = scmp.lt.s32.totalorder %s19, 5
      %p246 = pnand %p244, %p245
      %p247 = pneg %p246
      // Predicated region
      $region33: #{tpu_custom_call.1} parent=5 // pred_check
        _
      $region34: #{tpu_custom_call.1} parent=5 // pred_check_branch
        %249 = sbr.rel (%p246) target = $region36
      $region35: #{tpu_custom_call.1} parent=5 // pred_region
        %s250 = ssub.s32 %s19, 1
        %s251 = sand.u32 %s53, 1
        %s252 = scalar_lea.sflag [#allocation4], %s251
        %s253 = sand.u32 %s53, 1
        %s254 = smul.addr %s253, 16
        %s255 = scalar_lea.vmem [#allocation3], %s254
        // Predicated region
        $region37: #{tpu_custom_call.1} parent=35 // pred_check
          %p256 = pneg %p66
        $region38: #{tpu_custom_call.1} parent=35 // pred_check_branch
          %258 = sbr.rel (%p256) target = $region40
        $region39: #{tpu_custom_call.1} parent=35 // pred_region
          %259 = dma.done %s252, 256
        $region40: #{tpu_custom_call.1} parent=35 // pred_fallthru
          _
        %s260 = sand.u32 %s85, 1
        %s261 = scalar_lea.sflag [#allocation7], %s260
        %s262 = sand.u32 %s85, 1
        %s263 = smul.addr %s262, 8
        %s264 = scalar_lea.vmem [#allocation6], %s263
        // Predicated region
        $region41: #{tpu_custom_call.1} parent=35 // pred_check
          %p265 = pneg %p98
        $region42: #{tpu_custom_call.1} parent=35 // pred_check_branch
          %267 = sbr.rel (%p265) target = $region44
        $region43: #{tpu_custom_call.1} parent=35 // pred_region
          %268 = dma.done %s261, 128
        $region44: #{tpu_custom_call.1} parent=35 // pred_fallthru
          _
        %s269 = sand.u32 %s53, 1
        %s270 = scalar_lea.sflag [#allocation4], %s269
        %s271 = sand.u32 %s53, 1
        %s272 = smul.addr %s271, 16
        %s273 = scalar_lea.vmem [#allocation3], %s272
        %p274 = pneg %p66
        %p275 = pneg %p63
        %s276 = sand.u32 %s85, 1
        %s277 = scalar_lea.sflag [#allocation7], %s276
        %s278 = sand.u32 %s85, 1
        %s279 = smul.addr %s278, 8
        %s280 = scalar_lea.vmem [#allocation6], %s279
        %p281 = pneg %p98
        %p282 = pneg %p95
        %p283 = pneg %p119
        %p284 = pneg %p116
        %p285 = pneg %p140
        %p286 = pneg %p137
        %p287 = pneg %p170
        %p288 = pneg %p167
        %s289 = sand.u32 %s157, 1
        %s290 = scalar_lea.sflag [#allocation5], %s289
        %s291 = sand.u32 %s157, 1
        %s292 = smul.addr %s291, 16
        %s293 = scalar_lea.vmem [#allocation8], %s292
        %s294 = smul.u32 2, %s30
        %s295 = ssub.s32 5, %s294
        %p296 = scmp.lt.s32.totalorder %s295, 2
        %s297 = scalar_select %p296, %s295, 2
        %s298 = smul.u32 128, %s297
        %s299 = sadd.s32 %s30, 1
        %s300 = smul.u32 %s299, 2
        %s301 = smul.u32 2, %s30
        %v302 = vld [vmem:[%s255] sm:$0xff]
        %v303 = vld [vmem:[%s255 + $0x8] sm:$0xff]
        %304 = vst [vmem:[#allocation2] sm:$0xff] %v302
        %305 = vst [vmem:[#allocation2 + $0x8] sm:$0xff] %v303
        %v306 = vld [vmem:[%s264] sm:$0xff]
        %307 = vst [vmem:[#allocation2 + $0x10] sm:$0xff] %v306
        %s308 = smul.u32 %s31, 8
        %s309 = scalar_lea.vmem %s2, %s308
        %v310 = vld [vmem:[%s309] sm:$0xff]
        %s311 = scalar_lea.vmem %s3, %s308
        %v312 = vld [vmem:[%s311] sm:$0xff]
        %v313 = vld [vmem:[#allocation2] sm:$0xff]
        %v314 = vld [vmem:[#allocation2 + $0x8] sm:$0xff]
        %v315 = vld [vmem:[#allocation2] sm:$0xff]
        %v316 = vld [vmem:[#allocation2 + $0x8] sm:$0xff]
        %v317 = vld [vmem:[#allocation2 + $0x10] sm:$0xff]
        %321 = vrot.lane.b32.xlu0 %v315, 127
        %v322 = vpop.permute.xlu0 %321
        %323 = vrot.lane.b32.xlu0 %v316, 127
        %v324 = vpop.permute.xlu0 %323
        %325 = vrot.lane.b32.xlu0 %v317, 127
        %v326 = vpop.permute.xlu0 %325
        %vm327 = vcmask 1039360
        %v328 = vsel %vm327, %v322, %v324
        %v329 = vsel %vm327, %v324, %v326
        %332 = vrot.lane.b32.xlu0 %v315, 126
        %v333 = vpop.permute.xlu0 %332
        %334 = vrot.lane.b32.xlu0 %v316, 126
        %v335 = vpop.permute.xlu0 %334
        %336 = vrot.lane.b32.xlu0 %v317, 126
        %v337 = vpop.permute.xlu0 %336
        %vm338 = vcmask 1031168
        %v339 = vsel %vm338, %v333, %v335
        %v340 = vsel %vm338, %v335, %v337
        %343 = vrot.lane.b32.xlu0 %v315, 96
        %v344 = vpop.permute.xlu0 %343
        %345 = vrot.lane.b32.xlu0 %v316, 96
        %v346 = vpop.permute.xlu0 %345
        %347 = vrot.lane.b32.xlu0 %v317, 96
        %v348 = vpop.permute.xlu0 %347
        %vm349 = vcmask 785408
        %v350 = vsel %vm349, %v344, %v346
        %v351 = vsel %vm349, %v346, %v348
        %354 = vrot.lane.b32.xlu0 %v315, 95
        %v355 = vpop.permute.xlu0 %354
        %356 = vrot.lane.b32.xlu0 %v316, 95
        %v357 = vpop.permute.xlu0 %356
        %358 = vrot.lane.b32.xlu0 %v317, 95
        %v359 = vpop.permute.xlu0 %358
        %vm360 = vcmask 777216
        %v361 = vsel %vm360, %v355, %v357
        %v362 = vsel %vm360, %v357, %v359
        %365 = vrot.lane.b32.xlu0 %v315, 94
        %v366 = vpop.permute.xlu0 %365
        %367 = vrot.lane.b32.xlu0 %v316, 94
        %v368 = vpop.permute.xlu0 %367
        %369 = vrot.lane.b32.xlu0 %v317, 94
        %v370 = vpop.permute.xlu0 %369
        %vm371 = vcmask 769024
        %v372 = vsel %vm371, %v366, %v368
        %v373 = vsel %vm371, %v368, %v370
        %376 = vrot.lane.b32.xlu0 %v315, 64
        %v377 = vpop.permute.xlu0 %376
        %378 = vrot.lane.b32.xlu0 %v316, 64
        %v379 = vpop.permute.xlu0 %378
        %380 = vrot.lane.b32.xlu0 %v317, 64
        %v381 = vpop.permute.xlu0 %380
        %vm382 = vcmask 523264
        %v383 = vsel %vm382, %v377, %v379
        %v384 = vsel %vm382, %v379, %v381
        %387 = vrot.lane.b32.xlu0 %v315, 63
        %v388 = vpop.permute.xlu0 %387
        %389 = vrot.lane.b32.xlu0 %v316, 63
        %v390 = vpop.permute.xlu0 %389
        %391 = vrot.lane.b32.xlu0 %v317, 63
        %v392 = vpop.permute.xlu0 %391
        %vm393 = vcmask 515072
        %v394 = vsel %vm393, %v388, %v390
        %v395 = vsel %vm393, %v390, %v392
        %398 = vrot.lane.b32.xlu0 %v315, 62
        %v399 = vpop.permute.xlu0 %398
        %400 = vrot.lane.b32.xlu0 %v316, 62
        %v401 = vpop.permute.xlu0 %400
        %402 = vrot.lane.b32.xlu0 %v317, 62
        %v403 = vpop.permute.xlu0 %402
        %vm404 = vcmask 506880
        %v405 = vsel %vm404, %v399, %v401
        %v406 = vsel %vm404, %v401, %v403
        %410 = vset.pattern.permute.xlu0 0
        %411 = vperm.xlu0 %410, %v312
        %v412 = vpop.permute.xlu0 %411
        %vm414 = vcmask 588800
        %v416 = vsel %vm414, %v310, 0
        %418 = vmatprep.subr.mxu0 %v314
        %419 = vmatpush1.msra.mxu0 %v313
        %420 = vmatprep.subr.mxu0 %v329
        %421 = vmatpush1.msra.mxu0 %v328
        %422 = vmatprep.subr.mxu0 %v340
        %423 = vmatpush1.msra.mxu0 %v339
        %424 = vmatprep.subr.mxu0 %v351
        %425 = vmatpush1.msra.mxu0 %v350
        %426 = vmatprep.subr.mxu0 %v362
        %427 = vmatpush1.msra.mxu0 %v361
        %428 = vmatprep.subr.mxu0 %v373
        %429 = vmatpush1.msra.mxu0 %v372
        %430 = vmatprep.subr.mxu0 %v384
        %431 = vmatpush1.msra.mxu0 %v383
        %432 = vmatprep.subr.mxu0 %v395
        %433 = vmatpush1.msra.mxu0 %v394
        %434 = vmatprep.subr.mxu0 %v406
        %435 = vmatpush1.msra.mxu0 %v405
        %436 = vmatprep.subr.mxu0 0.0
        %437 = vmatpush1.msra.mxu0 0.0
        %438 = vmatprep.subr.mxu0 0.0
        %439 = vmatpush1.msra.mxu0 0.0
        %440 = vmatprep.subr.mxu0 0.0
        %441 = vmatpush1.msra.mxu0 0.0
        %442 = vmatprep.subr.mxu0 0.0
        %443 = vmatpush1.msra.mxu0 0.0
        %444 = vmatprep.subr.mxu0 0.0
        %445 = vmatpush1.msra.mxu0 0.0
        %446 = vmatprep.subr.mxu0 0.0
        %447 = vmatpush1.msra.mxu0 0.0
        %448 = vmatprep.subr.mxu0 0.0
        %449 = vmatpush1.msra.mxu0 0.0
        %450 = vmatprep.subr.mxu0 0.0
        %451 = vmatpush1.msra.mxu0 0.0
        %452 = vmatprep.subr.mxu0 0.0
        %453 = vmatpush1.msra.mxu0 0.0
        %454 = vmatprep.subr.mxu0 0.0
        %455 = vmatpush1.msra.mxu0 0.0
        %456 = vmatprep.subr.mxu0 0.0
        %457 = vmatpush1.msra.mxu0 0.0
        %458 = vmatprep.subr.mxu0 0.0
        %459 = vmatpush1.msra.mxu0 0.0
        %460 = vmatprep.subr.mxu0 0.0
        %461 = vmatpush1.msra.mxu0 0.0
        %462 = vmatprep.subr.mxu0 0.0
        %463 = vmatpush1.msra.mxu0 0.0
        %464 = vmatprep.subr.mxu0 0.0
        %465 = vmatpush1.msra.mxu0 0.0
        %466 = vmatprep.subr.mxu0 0.0
        %467 = vmatpush1.msra.mxu0 0.0
        %468 = vmatprep.subr.mxu0 0.0
        %469 = vmatpush1.msra.mxu0 0.0
        %470 = vmatprep.subr.mxu0 0.0
        %471 = vmatpush1.msra.mxu0 0.0
        %472 = vmatprep.subr.mxu0 0.0
        %473 = vmatpush1.msra.mxu0 0.0
        %474 = vmatprep.subr.mxu0 0.0
        %475 = vmatpush1.msra.mxu0 0.0
        %476 = vmatprep.subr.mxu0 0.0
        %477 = vmatpush1.msra.mxu0 0.0
        %478 = vmatprep.subr.mxu0 0.0
        %479 = vmatpush1.msra.mxu0 0.0
        %480 = vmatprep.subr.mxu0 0.0
        %481 = vmatpush1.msra.mxu0 0.0
        %482 = vmatprep.mubr.f32.mxu0 0.0
        %483 = vmatmul.mubr.f32.gmra.mrb[0].mxu0 %v416
        %v484 = vpop.f32.mrb[0].mxu0
        %v485 = vadd.f32 %v412, %v484
        %v486 = vpop.f32.mrb[0].mxu0
        %v487 = vadd.f32 %v412, %v486
        %488 = vdwg.mxu0
        %v489 = vxor.u32 %v485, 2147483648
        %v490 = vxor.u32 %v487, 2147483648
        %v491 = vmul.f32 %v489, 1.442695
        %v492 = vpow.pop %v491
        %v493 = vmul.f32 %v490, 1.442695
        %v494 = vpow.pop %v493
        %v495 = vadd.f32 %v492, 1.0
        %v496 = vadd.f32 %v494, 1.0
        %v497 = vrcp.pop %v495
        %v498 = vmul.f32 1.0, %v497
        %v499 = vrcp.pop %v496
        %v500 = vmul.f32 1.0, %v499
        %v501 = vmul.f32 %v485, %v498
        %v502 = vmul.f32 %v487, %v500
        %503 = vst [vmem:[%s293] sm:$0xff] %v501
        %504 = vst [vmem:[%s293 + $0x8] sm:$0xff] %v502
        %s505 = sand.u32 %s157, 1
        %s506 = scalar_lea.sflag [#allocation5], %s505
        %s507 = sand.u32 %s157, 1
        %s508 = smul.addr %s507, 16
        %s509 = scalar_lea.vmem [#allocation8], %s508
        // Predicated region
        $region45: #{tpu_custom_call.1} parent=35 // pred_check
          %p510 = pneg %p167
        $region46: #{tpu_custom_call.1} parent=35 // pred_check_branch
          %512 = sbr.rel (%p510) target = $region48
        $region47: #{tpu_custom_call.1} parent=35 // pred_region
          %s513 = smul.u32 2, %s30
          %s515 = ssub.s32 256, 256
          %516 = vsyncadd %s506, %s515
          %s517 = smul.addr %s31, 4
          %s518 = sadd.s32 %s513, %s517
          %s519 = smul.addr %s29, 4
          %s520 = sadd.s32 %s518, %s519
          %s521 = smul.addr %s520, 128
          %s522 = scalar_lea.hbm %s4, %s521
          %s524 = sshll.u32 %s509, 4
          %s525 = int_to_ptr.vmem [resolvable:$true] %s524
          %527 = dma.vmem_to_hbm [thread:$0]  %s525, 256, %s522, %s506
        $region48: #{tpu_custom_call.1} parent=35 // pred_fallthru
          _
      $region36: #{tpu_custom_call.1} parent=5 // pred_fallthru
        _
      %p528 = scmp.le.s32.totalorder 2, %s19
      // Predicated region
      $region49: #{tpu_custom_call.1} parent=5 // pred_check
        %p529 = pneg %p528
      $region50: #{tpu_custom_call.1} parent=5 // pred_check_branch
        %531 = sbr.rel (%p529) target = $region52
      $region51: #{tpu_custom_call.1} parent=5 // pred_region
        %s532 = ssub.s32 %s19, 2
        // Predicated region
        $region53: #{tpu_custom_call.1} parent=51 // pred_check
          %p533 = pneg %p173
        $region54: #{tpu_custom_call.1} parent=51 // pred_check_branch
          %535 = sbr.rel (%p533) target = $region56
        $region55: #{tpu_custom_call.1} parent=51 // pred_region
          %s536 = sand.u32 %s158, 1
          %s537 = scalar_lea.sflag [#allocation5], %s536
          %s538 = sand.u32 %s158, 1
          %s539 = smul.addr %s538, 16
          %s540 = scalar_lea.vmem [#allocation8], %s539
          %541 = dma.done %s537, 256
        $region56: #{tpu_custom_call.1} parent=51 // pred_fallthru
          _
      $region52: #{tpu_custom_call.1} parent=5 // pred_fallthru
        _
    $region6: #{tpu_custom_call.1} parent=1 // loop_footer
      %s23 = sadd.s32 1, %s19
    $region7: #{tpu_custom_call.1} parent=1 // loop_footer_branch
      %18 = sbr.rel target = $region3
    $region8: #{tpu_custom_call.1} parent=1 // loop_exit
      _
    %542 = vsyncpa [#allocation4], 1
    %s543 = scalar_lea.sflag [#allocation4], 1
    %544 = vsyncpa %s543, 1
    %545 = vsyncpa [#allocation7], 1
    %s546 = scalar_lea.sflag [#allocation7], 1
    %547 = vsyncpa %s546, 1
    %548 = vsyncpa [#allocation5], 1
    %s549 = scalar_lea.sflag [#allocation5], 1
    %550 = vsyncpa %s549, 1

</llo_original>
